<compile_context>
chip_gen: v7x
topology: tpu7x:2x2x1
jax: 0.10.0
libtpu: 0.0.40
codegen_flags: <defaults>
</compile_context>

<pallas_src>
import functools

import jax
import jax.numpy as jnp
from jax import lax
from jax.experimental import pallas as pl
from jax.experimental.pallas import tpu as pltpu


# ----------------------------------------------------------------------------
# Single-step kernels (spec-faithful vanilla_cell.forward).
# ----------------------------------------------------------------------------
def _cell_tf_kernel(state_ref,     # (1, H)  s_t
                    obs_pad_ref,   # (1, H)  y_true zero-padded to H lanes
                    w_ref,         # (H, H)  A.weight (PyTorch [out, in] layout)
                    out_ref,       # (3, H)  rows: [exp_pad, next_state, delta_pad]
                    *, n_obs: int):
    x = state_ref[...]                                        # (1, H) f32
    H = x.shape[1]
    col = lax.broadcasted_iota(jnp.int32, (1, H), 1)
    mask = col < n_obs

    # expectation = state @ ConMat.T  ==  state[:O]  (kept zero-padded to H)
    exp_pad = jnp.where(mask, x, 0.0)
    # delta = observation - expectation ; teach_forc = delta @ ConMat == delta_pad
    delta_pad = jnp.where(mask, obs_pad_ref[...] - x, 0.0)
    r_state = x - delta_pad
    # next_state = A(tanh(r_state)) = tanh(r_state) @ A.weight.T
    nxt = lax.dot_general(jnp.tanh(r_state), w_ref[...],
                          (((1,), (1,)), ((), ())),
                          preferred_element_type=jnp.float32)

    out_ref[0:1, :] = exp_pad
    out_ref[1:2, :] = nxt
    out_ref[2:3, :] = delta_pad


def _cell_nf_kernel(state_ref,     # (1, H)  s_t
                    w_ref,         # (H, H)  A.weight
                    out_ref,       # (2, H)  rows: [exp_pad, next_state]
                    *, n_obs: int):
    x = state_ref[...]                                        # (1, H) f32
    H = x.shape[1]
    col = lax.broadcasted_iota(jnp.int32, (1, H), 1)
    exp_pad = jnp.where(col < n_obs, x, 0.0)                  # state @ ConMat.T
    # r_state = state @ Ide == state  (identity matmul elided, exact)
    nxt = lax.dot_general(jnp.tanh(x), w_ref[...],
                          (((1,), (1,)), ((), ())),
                          preferred_element_type=jnp.float32)
    out_ref[0:1, :] = exp_pad
    out_ref[1:2, :] = nxt


def vanilla_cell_forward(state, a_weight, con_mat, teacher_forcing,
                         observation=None):
    """JAX/Pallas equivalent of vanilla_cell.forward (single timestep).

    state:       (n_hid_vars,) float32
    a_weight:    (n_hid_vars, n_hid_vars) float32, PyTorch Linear [out, in] layout
    con_mat:     (n_obs, n_hid_vars) -- eye by construction; only n_obs is used.
    observation: (n_obs,), required iff teacher_forcing.
    Returns (expectation, next_state, delta_term_or_None).
    """
    if teacher_forcing and observation is None:
        raise ValueError("`observation` must be provided when "
                         "`teacher_forcing` is True.")

    H = state.shape[0]
    O = con_mat.shape[0]
    f32 = jnp.float32

    state2 = state.astype(f32).reshape(1, H)
    w = a_weight.astype(f32)

    full = lambda shp: pl.BlockSpec(shp, lambda: tuple(0 for _ in shp))

    if teacher_forcing:
        obs_pad = jnp.zeros((1, H), f32).at[0, :O].set(observation.astype(f32))
        out = pl.pallas_call(
            functools.partial(_cell_tf_kernel, n_obs=O),
            grid=(),
            in_specs=[full((1, H)),      # state
                      full((1, H)),      # padded observation
                      full((H, H))],     # A.weight
            out_specs=full((3, H)),
            out_shape=jax.ShapeDtypeStruct((3, H), f32),
        )(state2, obs_pad, w)
        return out[0, :O], out[1, :], out[2, :O]

    out = pl.pallas_call(
        functools.partial(_cell_nf_kernel, n_obs=O),
        grid=(),
        in_specs=[full((1, H)),          # state
                  full((H, H))],         # A.weight
        out_specs=full((2, H)),
        out_shape=jax.ShapeDtypeStruct((2, H), f32),
    )(state2, w)
    return out[0, :O], out[1, :], None


# ----------------------------------------------------------------------------
# Fused teacher-forced rollout: whole recurrence in ONE grid step per batch
# block, unrolled inner loop, resident weight, lane-dense output slab.
# ----------------------------------------------------------------------------
def _rollout_kernel(state0_ref,    # (Bt, H)      initial states for this block
                    obs_ref,       # (T, Bt, H)   observations zero-padded to H lanes
                    w_ref,         # (H, H)       A.weight, resident across grid
                    out_ref,       # (3, Bt, T*H) rows: [exp_pad, next, delta_pad]
                    *, n_obs: int, seq_len: int):
    Bt, H = state0_ref.shape
    col = lax.broadcasted_iota(jnp.int32, (Bt, H), 1)
    mask = col < n_obs                      # hoisted: first O lanes
    w = w_ref[...]                          # hoisted weight load

    def step(t, x):                         # x: (Bt, H) carried state
        obs_t = obs_ref[t]                                  # (Bt, H)
        exp_pad = jnp.where(mask, x, 0.0)                   # state @ ConMat.T
        delta_pad = jnp.where(mask, obs_t - x, 0.0)         # (y - y_hat) padded
        r_state = x - delta_pad                             # state - delta @ ConMat
        nxt = lax.dot_general(jnp.tanh(r_state), w,         # tanh(r) @ A.weight.T
                              (((1,), (1,)), ((), ())),
                              preferred_element_type=jnp.float32)
        off = pl.multiple_of(t * H, H)
        out_ref[0, :, pl.ds(off, H)] = exp_pad
        out_ref[1, :, pl.ds(off, H)] = nxt
        out_ref[2, :, pl.ds(off, H)] = delta_pad
        return nxt

    lax.fori_loop(0, seq_len, step, state0_ref[...], unroll=True)


def vanilla_cell_rollout_batched(state0, a_weight, con_mat, observations,
                                 *, batch_tile=8):
    """Teacher-forced rollout of B independent sequences, fused in one kernel.

    state0:       (B, n_hid_vars)
    observations: (T, B, n_obs)
    Returns (expectations (T, B, n_obs), next_states (T, B, n_hid_vars),
             delta_terms (T, B, n_obs)).
    """
    B, H = state0.shape
    T = observations.shape[0]
    O = con_mat.shape[0]
    f32 = jnp.float32

    Bt = batch_tile
    nb = pl.cdiv(B, Bt)
    Bp = nb * Bt                              # pad batch to a multiple of Bt

    state_p = jnp.zeros((Bp, H), f32).at[:B].set(state0.astype(f32))
    obs_p = jnp.zeros((T, Bp, H), f32).at[:, :B, :O].set(observations.astype(f32))

    out = pl.pallas_call(
        functools.partial(_rollout_kernel, n_obs=O, seq_len=T),
        grid=(nb,),
        in_specs=[pl.BlockSpec((Bt, H), lambda b: (b, 0)),       # state0 block
                  pl.BlockSpec((T, Bt, H), lambda b: (0, b, 0)),  # obs block
                  pl.BlockSpec((H, H), lambda b: (0, 0))],        # weight, resident
        out_specs=pl.BlockSpec((3, Bt, T * H), lambda b: (0, b, 0)),
        out_shape=jax.ShapeDtypeStruct((3, Bp, T * H), f32),
        compiler_params=pltpu.CompilerParams(
            dimension_semantics=("parallel",)),  # batch blocks are independent
    )(state_p, obs_p, a_weight.astype(f32))

    out = out.reshape(3, Bp, T, H)[:, :B]          # (3, B, T, H)
    out = jnp.transpose(out, (0, 2, 1, 3))         # (3, T, B, H)
    return out[0, :, :, :O], out[1], out[2, :, :, :O]


def vanilla_cell_rollout(state0, a_weight, con_mat, observations):
    """Single-sequence teacher-forced rollout (wrapper over the batched kernel).

    state0: (n_hid_vars,), observations: (T, n_obs).
    """
    exps, states, deltas = vanilla_cell_rollout_batched(
        state0[None, :], a_weight, con_mat, observations[:, None, :])
    return exps[:, 0], states[:, 0], deltas[:, 0]


# ----------------------------------------------------------------------------
# Pure-JAX reference mirroring the PyTorch code.
# ----------------------------------------------------------------------------
def _reference_forward(state, a_weight, con_mat, teacher_forcing,
                       observation=None):
    expectation = state @ con_mat.T
    if teacher_forcing:
        delta = observation - expectation
        teach = delta @ con_mat
        r_state = state - teach
        next_state = jnp.tanh(r_state) @ a_weight.T
        return expectation, next_state, delta
    r_state = state @ jnp.eye(state.shape[-1], dtype=state.dtype)
    next_state = jnp.tanh(r_state) @ a_weight.T
    return expectation, next_state, None


if __name__ == "__main__":
    n_obs = 8
    n_hid_vars = 32
    seq_len = 8
    batch = 16
    init_range = (-0.75, 0.75)

    key = jax.random.PRNGKey(0)
    k_w, k_s, k_o, k_seq, k_bs, k_bo = jax.random.split(key, 6)

    # CustomLinear init: uniform in init_range, no bias
    a_weight = jax.random.uniform(k_w, (n_hid_vars, n_hid_vars),
                                  dtype=jnp.float32,
                                  minval=init_range[0], maxval=init_range[1])
    con_mat = jnp.eye(n_obs, n_hid_vars, dtype=jnp.float32)    # ConMat buffer
    state = jax.random.normal(k_s, (n_hid_vars,), dtype=jnp.float32)
    observation = jax.random.normal(k_o, (n_obs,), dtype=jnp.float32)
    obs_seq = jax.random.normal(k_seq, (seq_len, n_obs), dtype=jnp.float32)
    batch_states = jax.random.normal(k_bs, (batch, n_hid_vars), dtype=jnp.float32)
    batch_obs = jax.random.normal(k_bo, (seq_len, batch, n_obs), dtype=jnp.float32)

    # --- single step, teacher_forcing = True ---
    exp_tf, next_tf, delta_tf = vanilla_cell_forward(
        state, a_weight, con_mat, teacher_forcing=True, observation=observation)
    jax.block_until_ready((exp_tf, next_tf, delta_tf))
    r_exp, r_next, r_delta = _reference_forward(
        state, a_weight, con_mat, True, observation)
    assert jnp.allclose(exp_tf, r_exp, atol=1e-5)
    assert jnp.allclose(next_tf, r_next, atol=1e-5)
    assert jnp.allclose(delta_tf, r_delta, atol=1e-5)

    # --- single step, teacher_forcing = False ---
    exp_nf, next_nf, delta_nf = vanilla_cell_forward(
        state, a_weight, con_mat, teacher_forcing=False)
    jax.block_until_ready((exp_nf, next_nf))
    assert delta_nf is None
    r_exp2, r_next2, _ = _reference_forward(state, a_weight, con_mat, False)
    assert jnp.allclose(exp_nf, r_exp2, atol=1e-5)
    assert jnp.allclose(next_nf, r_next2, atol=1e-5)

    # --- fused, batched teacher-forced rollout (B sequences, T steps, 1 kernel) ---
    exps_b, states_b, deltas_b = vanilla_cell_rollout_batched(
        batch_states, a_weight, con_mat, batch_obs)
    jax.block_until_ready((exps_b, states_b, deltas_b))

    s = batch_states
    for t in range(seq_len):
        e_r = s @ con_mat.T
        d_r = batch_obs[t] - e_r
        r_r = s - d_r @ con_mat
        s_r = jnp.tanh(r_r) @ a_weight.T
        assert jnp.allclose(exps_b[t], e_r, atol=1e-4)
        assert jnp.allclose(states_b[t], s_r, atol=1e-4)
        assert jnp.allclose(deltas_b[t], d_r, atol=1e-4)
        s = s_r

    # --- single-sequence rollout (exercises batch padding path B=1 -> 8) ---
    exps, states_out, deltas = vanilla_cell_rollout(state, a_weight, con_mat, obs_seq)
    jax.block_until_ready((exps, states_out, deltas))
    s = state
    for t in range(seq_len):
        e_r, s_r, d_r = _reference_forward(s, a_weight, con_mat, True, obs_seq[t])
        assert jnp.allclose(exps[t], e_r, atol=1e-4)
        assert jnp.allclose(states_out[t], s_r, atol=1e-4)
        assert jnp.allclose(deltas[t], d_r, atol=1e-4)
        s = s_r

    print("KERNEL_OK")
</pallas_src>

<mosaic_0001>
module attributes {stable_mosaic.version = 11 : i64} {
  func.func @_cell_tf_kernel(%arg0: memref<1x32xf32, #tpu.memory_space<vmem>>, %arg1: memref<1x32xf32, #tpu.memory_space<vmem>>, %arg2: memref<32x32xf32, #tpu.memory_space<vmem>>, %arg3: memref<3x32xf32, #tpu.memory_space<vmem>>) attributes {dimension_semantics = [], scalar_prefetch = 0 : i64, scratch_operands = 0 : i64, tpu.core_type = #tpu.core_type<tc>} {
    %c0 = arith.constant 0 : index
    %c0_0 = arith.constant 0 : index
    %0 = vector.load %arg0[%c0, %c0_0] : memref<1x32xf32, #tpu.memory_space<vmem>>, vector<1x32xf32>
    %1 = tpu.iota {dimensions = array<i32: 1>} : vector<1x32xi32>
    %c8_i32 = arith.constant 8 : i32
    %2 = vector.broadcast %c8_i32 : i32 to vector<1x32xi32>
    %3 = arith.cmpi slt, %1, %2 : vector<1x32xi32>
    %cst = arith.constant 0.000000e+00 : f32
    %4 = vector.broadcast %cst : f32 to vector<1x32xf32>
    %5 = arith.select %3, %0, %4 : vector<1x32xi1>, vector<1x32xf32>
    %c0_1 = arith.constant 0 : index
    %c0_2 = arith.constant 0 : index
    %6 = vector.load %arg1[%c0_1, %c0_2] : memref<1x32xf32, #tpu.memory_space<vmem>>, vector<1x32xf32>
    %7 = arith.subf %6, %0 : vector<1x32xf32>
    %cst_3 = arith.constant 0.000000e+00 : f32
    %8 = vector.broadcast %cst_3 : f32 to vector<1x32xf32>
    %9 = arith.select %3, %7, %8 : vector<1x32xi1>, vector<1x32xf32>
    %10 = arith.subf %0, %9 : vector<1x32xf32>
    %11 = math.tanh %10 : vector<1x32xf32>
    %c0_4 = arith.constant 0 : index
    %c0_5 = arith.constant 0 : index
    %12 = vector.load %arg2[%c0_4, %c0_5] : memref<32x32xf32, #tpu.memory_space<vmem>>, vector<32x32xf32>
    %cst_6 = arith.constant dense<0.000000e+00> : vector<1x32xf32>
    %13 = tpu.matmul %11, %12, %cst_6 {dimension_numbers = #tpu.dot_dimension_numbers<[1], [1], [0], [0], [0, 0, 1, 0], [], []>} : vector<1x32xf32>, vector<32x32xf32>, vector<1x32xf32> -> vector<1x32xf32>
    %c0_7 = arith.constant 0 : index
    %c0_8 = arith.constant 0 : index
    %14 = vector.load %arg3[%c0_7, %c0_8] : memref<3x32xf32, #tpu.memory_space<vmem>>, vector<1x32xf32>
    tpu.vector_store %arg3[%c0_7, %c0_8], %5 {strides = array<i32>} : memref<3x32xf32, #tpu.memory_space<vmem>>, vector<1x32xf32>,
    %c1 = arith.constant 1 : index
    %c0_9 = arith.constant 0 : index
    %15 = vector.load %arg3[%c1, %c0_9] : memref<3x32xf32, #tpu.memory_space<vmem>>, vector<1x32xf32>
    tpu.vector_store %arg3[%c1, %c0_9], %13 {strides = array<i32>} : memref<3x32xf32, #tpu.memory_space<vmem>>, vector<1x32xf32>,
    %c2 = arith.constant 2 : index
    %c0_10 = arith.constant 0 : index
    %16 = vector.load %arg3[%c2, %c0_10] : memref<3x32xf32, #tpu.memory_space<vmem>>, vector<1x32xf32>
    tpu.vector_store %arg3[%c2, %c0_10], %9 {strides = array<i32>} : memref<3x32xf32, #tpu.memory_space<vmem>>, vector<1x32xf32>,
    return
  }
}

</mosaic_0001>

<llo_original>
// kernel: tpu_custom_call.1
$region0: #{tpu_custom_call.1}
  #allocation0 [shape = 'u32[]', space=smem, size = 0x4, offset = 0x4, fixed_abs, tag = 'smem constant byte address 0x4 - core index']
  #allocation1 [shape = 'u32[144,128]{1,0:T(1,128)}', space=vmem, size = 0x12000, scoped, tag = 'internal scratch']
  %s0 = inlined_call_operand.hbm [shape: f32[1,32], index: 0, kind: input, shape index: {}]
  %s1 = inlined_call_operand.vmem [shape: f32[1,32], index: 1, kind: input, shape index: {}]
  %s2 = inlined_call_operand.hbm [shape: f32[32,32], index: 2, kind: input, shape index: {}]
  %s3 = inlined_call_operand.hbm [shape: f32[3,32], index: 3, kind: output, shape index: {}]
  %s4 = sld [smem:[#allocation0]]
  $region30: #{tpu_custom_call.1} parent=0
    _
  %s6 = ssub.s32 1, %s4
  %s7 = scalar_select 0, %s6, %s4
  $region1: #{tpu_custom_call.1} parent=0
    #allocation2 [shape = 'u8[512]{0}', space=vmem, size = 0x400, scoped, tag = 'input window, operand 0, single buffered']
    #allocation3 [shape = 's32[1]{0}', space=sflag, size = 0x4, scoped, tag = 'scoped memory for tpu_custom_call.1']
    #allocation4 [shape = 's32[1]{0}', space=sflag, size = 0x4, scoped, tag = 'scoped memory for tpu_custom_call.1']
    #allocation5 [shape = 'u8[16384]{0}', space=vmem, size = 0x4000, scoped, tag = 'input window, operand 2, single buffered']
    #allocation6 [shape = 's32[1]{0}', space=sflag, size = 0x4, scoped, tag = 'scoped memory for tpu_custom_call.1']
    #allocation7 [shape = 'u8[2048]{0}', space=vmem, size = 0x800, scoped, tag = 'output window, operand 0, single buffered']
    %8 = vsyncpa [#allocation3], 0
    %9 = vsyncpa [#allocation6], 0
    %10 = vsyncpa [#allocation4], 0
    // Predicated region
    $region2: #{tpu_custom_call.1} parent=1 // pred_check
      _
    $region3: #{tpu_custom_call.1} parent=1 // pred_check_branch
      %12 = sbr.rel (0) target = $region5
    $region4: #{tpu_custom_call.1} parent=1 // pred_region
      %s14 = ssub.s32 16, 16
      %15 = vsyncadd [#allocation3], %s14
      %s17 = sshll.u32 [#allocation2], 4
      %s18 = int_to_ptr.vmem [resolvable:$true] %s17
      %20 = dma.hbm_to_vmem [thread:$0]  %s0, 16, %s18, [#allocation3]
    $region5: #{tpu_custom_call.1} parent=1 // pred_fallthru
      _
    // Predicated region
    $region6: #{tpu_custom_call.1} parent=1 // pred_check
      _
    $region7: #{tpu_custom_call.1} parent=1 // pred_check_branch
      %22 = sbr.rel (0) target = $region9
    $region8: #{tpu_custom_call.1} parent=1 // pred_region
      _
    $region9: #{tpu_custom_call.1} parent=1 // pred_fallthru
      _
    // Predicated region
    $region10: #{tpu_custom_call.1} parent=1 // pred_check
      _
    $region11: #{tpu_custom_call.1} parent=1 // pred_check_branch
      %24 = sbr.rel (0) target = $region13
    $region12: #{tpu_custom_call.1} parent=1 // pred_region
      %s26 = ssub.s32 512, 512
      %27 = vsyncadd [#allocation6], %s26
      %s28 = sshll.u32 [#allocation5], 4
      %s29 = int_to_ptr.vmem [resolvable:$true] %s28
      %34 = dma.hbm_to_vmem [thread:$0]  %s2, 512, %s29, [#allocation6], 128, 128, 8
    $region13: #{tpu_custom_call.1} parent=1 // pred_fallthru
      _
    // Predicated region
    $region14: #{tpu_custom_call.1} parent=1 // pred_check
      _
    $region15: #{tpu_custom_call.1} parent=1 // pred_check_branch
      %36 = sbr.rel (0) target = $region17
    $region16: #{tpu_custom_call.1} parent=1 // pred_region
      %37 = dma.done [#allocation3], 16
    $region17: #{tpu_custom_call.1} parent=1 // pred_fallthru
      _
    // Predicated region
    $region18: #{tpu_custom_call.1} parent=1 // pred_check
      _
    $region19: #{tpu_custom_call.1} parent=1 // pred_check_branch
      %39 = sbr.rel (0) target = $region21
    $region20: #{tpu_custom_call.1} parent=1 // pred_region
      %40 = dma.done [#allocation6], 512
    $region21: #{tpu_custom_call.1} parent=1 // pred_fallthru
      _
    %v41 = vld [vmem:[#allocation2] sm:$0x1]
    %v42 = vlaneseq
    %v43 = vand.u32 %v42, 127
    %vm44 = vcmp.lt.s32.totalorder %v43, 8
    %v45 = vsel %vm44, %v41, 0.0
    %v46 = vld [vmem:[%s1] sm:$0x1]
    %v47 = vsub.f32 %v46, %v41
    %v48 = vsel %vm44, %v47, 0.0
    %v49 = vsub.f32 %v41, %v48
    %v50 = vtanh.pop %v49
    %v51 = vld [vmem:[#allocation5] sm:$0xff]
    %v52 = vld [vmem:[#allocation5 + $0x8] sm:$0xff]
    %v53 = vld [vmem:[#allocation5 + $0x10] sm:$0xff]
    %v54 = vld [vmem:[#allocation5 + $0x18] sm:$0xff]
    %vm55 = vcmask 261120
    %v57 = vsel %vm55, %v50, 0
    %v60 = vsel %vm55, %v51, 0
    %v63 = vsel %vm55, %v52, 0
    %v66 = vsel %vm55, %v53, 0
    %v69 = vsel %vm55, %v54, 0
    %71 = vmatprep.subr.mxu0 0.0
    %72 = vmatpush1.xpose.msra.mxu0 %v60
    %73 = vmatprep.subr.mxu0 0.0
    %74 = vmatpush1.xpose.msra.mxu0 %v63
    %75 = vmatprep.subr.mxu0 0.0
    %76 = vmatpush1.xpose.msra.mxu0 %v66
    %77 = vmatprep.subr.mxu0 0.0
    %78 = vmatpush1.xpose.msra.mxu0 %v69
    %79 = vmatprep.subr.mxu0 0.0
    %80 = vmatpush1.xpose.msra.mxu0 0.0
    %81 = vmatprep.subr.mxu0 0.0
    %82 = vmatpush1.xpose.msra.mxu0 0.0
    %83 = vmatprep.subr.mxu0 0.0
    %84 = vmatpush1.xpose.msra.mxu0 0.0
    %85 = vmatprep.subr.mxu0 0.0
    %86 = vmatpush1.xpose.msra.mxu0 0.0
    %87 = vmatprep.subr.mxu0 0.0
    %88 = vmatpush1.xpose.msra.mxu0 0.0
    %89 = vmatprep.subr.mxu0 0.0
    %90 = vmatpush1.xpose.msra.mxu0 0.0
    %91 = vmatprep.subr.mxu0 0.0
    %92 = vmatpush1.xpose.msra.mxu0 0.0
    %93 = vmatprep.subr.mxu0 0.0
    %94 = vmatpush1.xpose.msra.mxu0 0.0
    %95 = vmatprep.subr.mxu0 0.0
    %96 = vmatpush1.xpose.msra.mxu0 0.0
    %97 = vmatprep.subr.mxu0 0.0
    %98 = vmatpush1.xpose.msra.mxu0 0.0
    %99 = vmatprep.subr.mxu0 0.0
    %100 = vmatpush1.xpose.msra.mxu0 0.0
    %101 = vmatprep.subr.mxu0 0.0
    %102 = vmatpush1.xpose.msra.mxu0 0.0
    %103 = vmatprep.subr.mxu0 0.0
    %104 = vmatpush1.xpose.msra.mxu0 0.0
    %105 = vmatprep.subr.mxu0 0.0
    %106 = vmatpush1.xpose.msra.mxu0 0.0
    %107 = vmatprep.subr.mxu0 0.0
    %108 = vmatpush1.xpose.msra.mxu0 0.0
    %109 = vmatprep.subr.mxu0 0.0
    %110 = vmatpush1.xpose.msra.mxu0 0.0
    %111 = vmatprep.subr.mxu0 0.0
    %112 = vmatpush1.xpose.msra.mxu0 0.0
    %113 = vmatprep.subr.mxu0 0.0
    %114 = vmatpush1.xpose.msra.mxu0 0.0
    %115 = vmatprep.subr.mxu0 0.0
    %116 = vmatpush1.xpose.msra.mxu0 0.0
    %117 = vmatprep.subr.mxu0 0.0
    %118 = vmatpush1.xpose.msra.mxu0 0.0
    %119 = vmatprep.subr.mxu0 0.0
    %120 = vmatpush1.xpose.msra.mxu0 0.0
    %121 = vmatprep.subr.mxu0 0.0
    %122 = vmatpush1.xpose.msra.mxu0 0.0
    %123 = vmatprep.subr.mxu0 0.0
    %124 = vmatpush1.xpose.msra.mxu0 0.0
    %125 = vmatprep.subr.mxu0 0.0
    %126 = vmatpush1.xpose.msra.mxu0 0.0
    %127 = vmatprep.subr.mxu0 0.0
    %128 = vmatpush1.xpose.msra.mxu0 0.0
    %129 = vmatprep.subr.mxu0 0.0
    %130 = vmatpush1.xpose.msra.mxu0 0.0
    %131 = vmatprep.subr.mxu0 0.0
    %132 = vmatpush1.xpose.msra.mxu0 0.0
    %133 = vmatprep.subr.mxu0 0.0
    %134 = vmatpush1.xpose.msra.mxu0 0.0
    %135 = vmatprep.mubr.f32.mxu0 0.0
    %136 = vmatmul.mubr.f32.gmra.mrb[0].mxu0 %v57
    %v137 = vpop.f32.mrb[0].mxu0
    %v138 = vadd.f32 0.0, %v137
    %v139 = vpop.f32.mrb[0].mxu0
    %140 = vdwg.mxu0
    %vm141 = vcmask 253952
    %142 = vst.msk [vmem:[#allocation7] sm:$0x1] %vm141, %v45
    %143 = vst.msk [vmem:[#allocation7 + $0x1] sm:$0x1] %vm141, %v138
    %144 = vst.msk [vmem:[#allocation7 + $0x2] sm:$0x1] %vm141, %v48
    // Predicated region
    $region22: #{tpu_custom_call.1} parent=1 // pred_check
      _
    $region23: #{tpu_custom_call.1} parent=1 // pred_check_branch
      %146 = sbr.rel (0) target = $region25
    $region24: #{tpu_custom_call.1} parent=1 // pred_region
      %s148 = ssub.s32 64, 64
      %149 = vsyncadd [#allocation4], %s148
      %s151 = sshll.u32 [#allocation7], 4
      %s152 = int_to_ptr.vmem [resolvable:$true] %s151
      %154 = dma.vmem_to_hbm [thread:$0]  %s152, 64, %s3, [#allocation4]
    $region25: #{tpu_custom_call.1} parent=1 // pred_fallthru
      _
    // Predicated region
    $region26: #{tpu_custom_call.1} parent=1 // pred_check
      _
    $region27: #{tpu_custom_call.1} parent=1 // pred_check_branch
      %156 = sbr.rel (0) target = $region29
    $region28: #{tpu_custom_call.1} parent=1 // pred_region
      %157 = dma.done [#allocation4], 64
    $region29: #{tpu_custom_call.1} parent=1 // pred_fallthru
      _
    %158 = vsyncpa [#allocation3], 1
    %159 = vsyncpa [#allocation6], 1
    %160 = vsyncpa [#allocation4], 1

</llo_original>
